<compile_context>
chip_gen: v7x
topology: tpu7x:2x2x1
jax: 0.10.0
libtpu: 0.0.40
codegen_flags: <defaults>
</compile_context>

<pallas_src>
import jax
import jax.numpy as jnp
from math import log
from jax.experimental import pallas as pl
from jax.experimental.pallas import tpu as pltpu

_LANES = 128


def _hill_kernel(p_ref, x_ref, o_ref):
    # p_ref (SMEM, f32[3]) holds precomputed scalars: [n, n*log(K), 1 + K**n]
    n = p_ref[0]
    n_logK = p_ref[1]
    scale = p_ref[2]

    x = x_ref[...].astype(jnp.float32)
    x_min = 1.0 - x
    # x_min**n / (K**n + x_min**n) == sigmoid(n*log(x_min) - n*log(K)).
    # Explicit tanh form: 2 EUP pushes (log + tanh), no divide / approx reciprocal.
    z = n * jnp.log(x_min) - n_logK
    ratio = 0.5 * (1.0 + jnp.tanh(0.5 * z))
    o_ref[...] = (1.0 - scale * ratio).astype(o_ref.dtype)


def _sublanes_for(dtype):
    # f32 -> 8, bf16/fp16 -> 16, int8/fp8 -> 32 (packed-sublane tiles)
    return {4: 8, 2: 16, 1: 32}.get(jnp.dtype(dtype).itemsize, 8)


def hill_transfer(x, K_param, n_param, *, tile_rows=4096):
    """Applies the Hill transfer function elementwise via a Pallas TPU kernel.

    x        : any-shape float array (values expected in [0, 1])
    K_param  : shape (1,), log-space K parameter
    n_param  : shape (1,), log-space (n - 1) parameter
    """
    orig_shape = x.shape
    dtype = x.dtype
    sub = _sublanes_for(dtype)

    # Scalar parameter math hoisted out of the per-tile kernel body.
    logK = K_param[0].astype(jnp.float32)            # log-space parameter == log(K)
    n = 1.0 + jnp.exp(n_param[0].astype(jnp.float32))
    Kn = jnp.exp(n * logK)                           # K ** n
    scale = 1.0 + Kn
    n_logK = n * logK
    params = jnp.stack([n, n_logK, scale]).astype(jnp.float32)   # SMEM scalars

    numel = x.size
    xf = x.reshape(-1)

    # Bulk = largest prefix made of whole (sublane, 128) tiles -> kernel, zero padding.
    chunk = sub * _LANES
    bulk = (numel // chunk) * chunk
    tail = numel - bulk

    outs = []
    if bulk:
        rows = bulk // _LANES                        # multiple of `sub`
        # Ensure >=2 grid steps when possible so ("parallel",) feeds both v7x TCs.
        if rows >= 2 * sub:
            half = ((pl.cdiv(rows, 2) + sub - 1) // sub) * sub
            tr = min(tile_rows, half)
        else:
            tr = rows
        grid = (pl.cdiv(rows, tr),)                  # last block may be partial (masked)

        x2 = xf[:bulk].reshape(rows, _LANES)
        out2 = pl.pallas_call(
            _hill_kernel,
            out_shape=jax.ShapeDtypeStruct((rows, _LANES), dtype),
            grid_spec=pltpu.PrefetchScalarGridSpec(
                num_scalar_prefetch=0,
                grid=grid,
                in_specs=[
                    pl.BlockSpec(memory_space=pltpu.MemorySpace.SMEM),  # params (scalars)
                    pl.BlockSpec((tr, _LANES), lambda i: (i, 0)),       # x tile
                ],
                out_specs=pl.BlockSpec((tr, _LANES), lambda i: (i, 0)),
            ),
            compiler_params=pltpu.CompilerParams(
                dimension_semantics=("parallel",),
            ),
        )(params, x2)
        outs.append(out2.reshape(-1))

    if tail:
        # Ragged tail (< sub*128 elements): plain jnp in the wrapper instead of a
        # full-array pad/concatenate/slice round trip through HBM.
        xt = xf[bulk:].astype(jnp.float32)
        zt = n * jnp.log(1.0 - xt) - n_logK
        outs.append((1.0 - scale * 0.5 * (1.0 + jnp.tanh(0.5 * zt))).astype(dtype))

    out = outs[0] if len(outs) == 1 else jnp.concatenate(outs)
    return out.reshape(orig_shape)


def _hill_ref(x, K_param, n_param):
    # Pure-JAX reference, mirroring the torch module verbatim.
    K = jnp.exp(K_param[0])
    n = 1.0 + jnp.exp(n_param[0])
    x_min = 1.0 - x.astype(jnp.float32)
    out = (x_min ** n) / (K ** n + x_min ** n) * (1.0 + K ** n)
    return (1.0 - out).astype(x.dtype)


if __name__ == "__main__":
    key = jax.random.PRNGKey(0)
    k_x, k_K, k_n = jax.random.split(key, 3)

    # Deterministic parameter init matching torch.normal(mean=log(K), std=0.2)
    # and torch.normal(mean=log(n-1), std=0.4) for K=0.5, n=2.
    K_init = 0.5
    n_init = 2
    K_param = (log(K_init) + 0.2 * jax.random.normal(k_K, (1,))).astype(jnp.float32)
    n_param = (log(n_init - 1) + 0.4 * jax.random.normal(k_n, (1,))).astype(jnp.float32)

    # Input values in [0, 1] (Hill function domain), NCHW-like shape.
    x = jax.random.uniform(k_x, (2, 4, 16, 16), dtype=jnp.float32)

    y = jax.block_until_ready(hill_transfer(x, K_param, n_param))
    y_ref = _hill_ref(x, K_param, n_param)

    assert y.shape == x.shape and y.dtype == x.dtype
    assert bool(jnp.all(jnp.isfinite(y)))
    assert jnp.allclose(y, y_ref, atol=1e-3, rtol=1e-3)

    print("KERNEL_OK")
</pallas_src>

<mosaic_0001>
module attributes {stable_mosaic.version = 11 : i64} {
  func.func @_hill_kernel(%arg0: i32, %arg1: memref<3xf32, #tpu.memory_space<smem>>, %arg2: memref<8x128xf32, #tpu.memory_space<vmem>>, %arg3: memref<8x128xf32, #tpu.memory_space<vmem>>) attributes {dimension_semantics = [#tpu.dimension_semantics<parallel>], iteration_bounds = array<i64: 2>, scalar_prefetch = 0 : i64, scratch_operands = 0 : i64, tpu.core_type = #tpu.core_type<tc>, window_params = [{transform_indices = @transform_0, window_bounds = array<i64: 3>}, {transform_indices = @transform_1, window_bounds = array<i64: 8, 128>}, {transform_indices = @transform_2, window_bounds = array<i64: 8, 128>}]} {
    %c0 = arith.constant 0 : index
    %0 = memref.load %arg1[%c0] : memref<3xf32, #tpu.memory_space<smem>>
    %c1 = arith.constant 1 : index
    %1 = memref.load %arg1[%c1] : memref<3xf32, #tpu.memory_space<smem>>
    %c2 = arith.constant 2 : index
    %2 = memref.load %arg1[%c2] : memref<3xf32, #tpu.memory_space<smem>>
    %c0_0 = arith.constant 0 : index
    %c0_1 = arith.constant 0 : index
    %3 = vector.load %arg2[%c0_0, %c0_1] : memref<8x128xf32, #tpu.memory_space<vmem>>, vector<8x128xf32>
    %cst = arith.constant 1.000000e+00 : f32
    %4 = vector.broadcast %cst : f32 to vector<8x128xf32>
    %5 = arith.subf %4, %3 : vector<8x128xf32>
    %6 = math.log %5 : vector<8x128xf32>
    %7 = vector.broadcast %0 : f32 to vector<8x128xf32>
    %8 = arith.mulf %7, %6 : vector<8x128xf32>
    %9 = vector.broadcast %1 : f32 to vector<8x128xf32>
    %10 = arith.subf %8, %9 : vector<8x128xf32>
    %cst_2 = arith.constant 5.000000e-01 : f32
    %11 = vector.broadcast %cst_2 : f32 to vector<8x128xf32>
    %12 = arith.mulf %11, %10 : vector<8x128xf32>
    %13 = math.tanh %12 : vector<8x128xf32>
    %cst_3 = arith.constant 1.000000e+00 : f32
    %14 = vector.broadcast %cst_3 : f32 to vector<8x128xf32>
    %15 = arith.addf %14, %13 : vector<8x128xf32>
    %cst_4 = arith.constant 5.000000e-01 : f32
    %16 = vector.broadcast %cst_4 : f32 to vector<8x128xf32>
    %17 = arith.mulf %16, %15 : vector<8x128xf32>
    %18 = vector.broadcast %2 : f32 to vector<8x128xf32>
    %19 = arith.mulf %18, %17 : vector<8x128xf32>
    %cst_5 = arith.constant 1.000000e+00 : f32
    %20 = vector.broadcast %cst_5 : f32 to vector<8x128xf32>
    %21 = arith.subf %20, %19 : vector<8x128xf32>
    %c0_6 = arith.constant 0 : index
    %c0_7 = arith.constant 0 : index
    %22 = vector.load %arg3[%c0_6, %c0_7] : memref<8x128xf32, #tpu.memory_space<vmem>>, vector<8x128xf32>
    tpu.vector_store %arg3[%c0_6, %c0_7], %21 {strides = array<i32>} : memref<8x128xf32, #tpu.memory_space<vmem>>, vector<8x128xf32>,
    return
  }
  func.func @transform_0(%arg0: i32) -> i32 {
    %c0_i32 = arith.constant 0 : i32
    %c0_i32_0 = arith.constant 0 : i32
    return %c0_i32 : i32
  }
  func.func @transform_1(%arg0: i32) -> (i32, i32) {
    %c0_i32 = arith.constant 0 : i32
    %c0_i32_0 = arith.constant 0 : i32
    return %arg0, %c0_i32 : i32, i32
  }
  func.func @transform_2(%arg0: i32) -> (i32, i32) {
    %c0_i32 = arith.constant 0 : i32
    %c0_i32_0 = arith.constant 0 : i32
    return %arg0, %c0_i32 : i32, i32
  }
}

</mosaic_0001>

<llo_original>
// kernel: tpu_custom_call.1
$region0: #{tpu_custom_call.1}
  #allocation0 [shape = 'u32[]', space=smem, size = 0x4, offset = 0x4, fixed_abs, tag = 'smem constant byte address 0x4 - core index']
  #allocation1 [shape = 'u32[144,128]{1,0:T(1,128)}', space=vmem, size = 0x12000, scoped, tag = 'internal scratch']
  %s0 = inlined_call_operand.hbm [shape: f32[3], index: 0, kind: input, shape index: {}]
  %s1 = inlined_call_operand.hbm [shape: f32[16,128], index: 1, kind: input, shape index: {}]
  %s2 = inlined_call_operand.hbm [shape: f32[16,128], index: 2, kind: output, shape index: {}]
  %s3 = sld [smem:[#allocation0]]
  $region49: #{tpu_custom_call.1} parent=0
    _
  %s5 = ssub.s32 1, %s3
  %s6 = scalar_select 0, %s5, %s3
  $region1: #{tpu_custom_call.1} parent=0
    #allocation2 [shape = 'u8[512]{0}', space=smem, size = 0x200, scoped, tag = 'input window, operand 0, single buffered']
    #allocation3 [shape = 's32[2]{0}', space=sflag, size = 0x8, scoped, tag = 'scoped memory for tpu_custom_call.1']
    #allocation4 [shape = 's32[2]{0}', space=sflag, size = 0x8, scoped, tag = 'scoped memory for tpu_custom_call.1']
    #allocation5 [shape = 's32[2]{0}', space=sflag, size = 0x8, scoped, tag = 'scoped memory for tpu_custom_call.1']
    #allocation6 [shape = 'u8[8192]{0}', space=vmem, size = 0x2000, scoped, tag = 'input window, operand 1']
    #allocation7 [shape = 'u8[8192]{0}', space=vmem, size = 0x2000, scoped, tag = 'output window, operand 0']
    %7 = vsyncpa [#allocation5], 0
    %8 = vsyncpa [#allocation3], 0
    %s9 = scalar_lea.sflag [#allocation3], 1
    %10 = vsyncpa %s9, 0
    %11 = vsyncpa [#allocation4], 0
    %s12 = scalar_lea.sflag [#allocation4], 1
    %13 = vsyncpa %s12, 0
    loop: start=0, step=1, limit=4
    $region2: #{tpu_custom_call.1} parent=1 // loop_pre_header
      _
    $region3: #{tpu_custom_call.1} parent=1 // loop_header
      %s15 = sphi 0, %s19
      %p16 = scmp.ge.s32.totalorder %s15, 4
      %s23 = sphi 0, %s23
      %s25 = sphi 0, %s23
      %s26 = sphi 0, %s25
      %s40 = sphi 0, %s26
      %s46 = sphi 0, %s48
      %s49 = sphi 0, %s46
      %s50 = sphi 0, %s49
      %s66 = sphi 0, %s50
      %s72 = sphi 0, %s74
      %s75 = sphi 0, %s72
      %s76 = sphi 0, %s75
      %s92 = sphi 0, %s76
    $region4: #{tpu_custom_call.1} parent=1 // loop_header_branch
      %18 = sbr.rel (%p16) target = $region8
    $region5: #{tpu_custom_call.1} parent=1 // loop_body
      %s20 = ssub.s32 %s15, 1
      %s21 = ssub.s32 %s15, 2
      %s22 = sadd.s32 %s15, 1
      %s24 = sadd.s32 %s23, 1
      %p27 = scmp.eq.s32.totalorder %s15, 1
      %p28 = scmp.ne.s32.totalorder %s23, %s25
      %p29 = scmp.eq.s32.totalorder %s15, 0
      %p30 = por %p28, %p29
      %p31 = scmp.ne.s32.totalorder %s23, %s25
      %p32 = scmp.eq.s32.totalorder %s20, 1
      %p33 = por %p31, %p32
      %p34 = scmp.ne.s32.totalorder %s25, %s26
      %p35 = scmp.eq.s32.totalorder %s20, 0
      %p36 = por %p34, %p35
      %p37 = scmp.ne.s32.totalorder %s25, %s26
      %p38 = scmp.eq.s32.totalorder %s21, 1
      %p39 = por %p37, %p38
      %p41 = scmp.ne.s32.totalorder %s26, %s40
      %p42 = scmp.eq.s32.totalorder %s21, 0
      %p43 = por %p41, %p42
      %s44 = ssub.s32 %s15, %s22
      %p45 = scmp.eq.s32.totalorder %s44, 0
      %s47 = sadd.s32 %s46, 1
      %s48 = scalar_select %p45, %s46, %s47
      %p51 = pneg %p45
      %p52 = scmp.eq.s32.totalorder %s15, 1
      %p53 = por %p51, %p52
      %p54 = scmp.ne.s32.totalorder %s46, %s49
      %p55 = scmp.eq.s32.totalorder %s15, 0
      %p56 = por %p54, %p55
      %p57 = scmp.ne.s32.totalorder %s46, %s49
      %p58 = scmp.eq.s32.totalorder %s20, 1
      %p59 = por %p57, %p58
      %p60 = scmp.ne.s32.totalorder %s49, %s50
      %p61 = scmp.eq.s32.totalorder %s20, 0
      %p62 = por %p60, %p61
      %p63 = scmp.ne.s32.totalorder %s49, %s50
      %p64 = scmp.eq.s32.totalorder %s21, 1
      %p65 = por %p63, %p64
      %p67 = scmp.ne.s32.totalorder %s50, %s66
      %p68 = scmp.eq.s32.totalorder %s21, 0
      %p69 = por %p67, %p68
      %s70 = ssub.s32 %s15, %s22
      %p71 = scmp.eq.s32.totalorder %s70, 0
      %s73 = sadd.s32 %s72, 1
      %s74 = scalar_select %p71, %s72, %s73
      %p77 = pneg %p71
      %p78 = scmp.eq.s32.totalorder %s15, 1
      %p79 = por %p77, %p78
      %p80 = scmp.ne.s32.totalorder %s72, %s75
      %p81 = scmp.eq.s32.totalorder %s15, 0
      %p82 = por %p80, %p81
      %p83 = scmp.ne.s32.totalorder %s72, %s75
      %p84 = scmp.eq.s32.totalorder %s20, 1
      %p85 = por %p83, %p84
      %p86 = scmp.ne.s32.totalorder %s75, %s76
      %p87 = scmp.eq.s32.totalorder %s20, 0
      %p88 = por %p86, %p87
      %p89 = scmp.ne.s32.totalorder %s75, %s76
      %p90 = scmp.eq.s32.totalorder %s21, 1
      %p91 = por %p89, %p90
      %p93 = scmp.ne.s32.totalorder %s76, %s92
      %p94 = scmp.eq.s32.totalorder %s21, 0
      %p95 = por %p93, %p94
      %p96 = scmp.le.s32.totalorder 1, %s15
      %p97 = scmp.lt.s32.totalorder %s15, 3
      %p98 = pnand %p96, %p97
      %p99 = pneg %p98
      // Predicated region
      $region9: #{tpu_custom_call.1} parent=5 // pred_check
        _
      $region10: #{tpu_custom_call.1} parent=5 // pred_check_branch
        %101 = sbr.rel (%p98) target = $region12
      $region11: #{tpu_custom_call.1} parent=5 // pred_region
        %s102 = ssub.s32 %s15, 1
        // Predicated region
        $region13: #{tpu_custom_call.1} parent=11 // pred_check
          %p103 = pneg %p36
        $region14: #{tpu_custom_call.1} parent=11 // pred_check_branch
          %105 = sbr.rel (%p103) target = $region16
        $region15: #{tpu_custom_call.1} parent=11 // pred_region
          %s107 = ssub.s32 16, 16
          %108 = vsyncadd [#allocation5], %s107
          %111 = dma.hbm_to_smem %s0, 16, [#allocation2], [#allocation5]
        $region16: #{tpu_custom_call.1} parent=11 // pred_fallthru
          _
      $region12: #{tpu_custom_call.1} parent=5 // pred_fallthru
        _
      %p112 = scmp.lt.s32.totalorder %s15, 2
      // Predicated region
      $region17: #{tpu_custom_call.1} parent=5 // pred_check
        %p113 = pneg %p112
      $region18: #{tpu_custom_call.1} parent=5 // pred_check_branch
        %115 = sbr.rel (%p113) target = $region20
      $region19: #{tpu_custom_call.1} parent=5 // pred_region
        // Predicated region
        $region21: #{tpu_custom_call.1} parent=19 // pred_check
          %p116 = pneg %p56
        $region22: #{tpu_custom_call.1} parent=19 // pred_check_branch
          %118 = sbr.rel (%p116) target = $region24
        $region23: #{tpu_custom_call.1} parent=19 // pred_region
          %s119 = sand.u32 %s46, 1
          %s120 = scalar_lea.sflag [#allocation3], %s119
          %s121 = sand.u32 %s46, 1
          %s122 = smul.addr %s121, 8
          %s123 = scalar_lea.vmem [#allocation6], %s122
          %s125 = ssub.s32 128, 128
          %126 = vsyncadd %s120, %s125
          %s127 = smul.addr %s15, 128
          %s128 = scalar_lea.hbm %s1, %s127
          %s130 = sshll.u32 %s123, 4
          %s131 = int_to_ptr.vmem [resolvable:$true] %s130
          %133 = dma.hbm_to_vmem [thread:$0]  %s128, 128, %s131, %s120
        $region24: #{tpu_custom_call.1} parent=19 // pred_fallthru
          _
      $region20: #{tpu_custom_call.1} parent=5 // pred_fallthru
        _
      %p134 = scmp.le.s32.totalorder 1, %s15
      %p135 = scmp.lt.s32.totalorder %s15, 3
      %p136 = pnand %p134, %p135
      %p137 = pneg %p136
      // Predicated region
      $region25: #{tpu_custom_call.1} parent=5 // pred_check
        _
      $region26: #{tpu_custom_call.1} parent=5 // pred_check_branch
        %139 = sbr.rel (%p136) target = $region28
      $region27: #{tpu_custom_call.1} parent=5 // pred_region
        %s140 = ssub.s32 %s15, 1
        // Predicated region
        $region29: #{tpu_custom_call.1} parent=27 // pred_check
          %p141 = pneg %p36
        $region30: #{tpu_custom_call.1} parent=27 // pred_check_branch
          %143 = sbr.rel (%p141) target = $region32
        $region31: #{tpu_custom_call.1} parent=27 // pred_region
          %144 = dma.done [#allocation5], 16
        $region32: #{tpu_custom_call.1} parent=27 // pred_fallthru
          _
        %s145 = sand.u32 %s49, 1
        %s146 = scalar_lea.sflag [#allocation3], %s145
        %s147 = sand.u32 %s49, 1
        %s148 = smul.addr %s147, 8
        %s149 = scalar_lea.vmem [#allocation6], %s148
        // Predicated region
        $region33: #{tpu_custom_call.1} parent=27 // pred_check
          %p150 = pneg %p62
        $region34: #{tpu_custom_call.1} parent=27 // pred_check_branch
          %152 = sbr.rel (%p150) target = $region36
        $region35: #{tpu_custom_call.1} parent=27 // pred_region
          %153 = dma.done %s146, 128
        $region36: #{tpu_custom_call.1} parent=27 // pred_fallthru
          _
        %154 = sfence
        %p155 = pneg %p36
        %p156 = pneg %p33
        %s157 = sand.u32 %s49, 1
        %s158 = scalar_lea.sflag [#allocation3], %s157
        %s159 = sand.u32 %s49, 1
        %s160 = smul.addr %s159, 8
        %s161 = scalar_lea.vmem [#allocation6], %s160
        %p162 = pneg %p62
        %p163 = pneg %p59
        %p164 = pneg %p88
        %p165 = pneg %p85
        %s166 = sand.u32 %s75, 1
        %s167 = scalar_lea.sflag [#allocation4], %s166
        %s168 = sand.u32 %s75, 1
        %s169 = smul.addr %s168, 8
        %s170 = scalar_lea.vmem [#allocation7], %s169
        %s171 = sld [smem:[#allocation2]]
        %s172 = sld [smem:[#allocation2 + $0x1]]
        %s173 = sld [smem:[#allocation2 + $0x2]]
        %v174 = vld [vmem:[%s149] sm:$0xff]
        %v175 = vsub.f32 1.0, %v174
        %v176 = vlog2.pop %v175
        %v177 = vmul.f32 %v176, 0.6931472
        %v178 = vstv %s171
        %v179 = vmul.f32 %v178, %v177
        %v180 = vstv %s172
        %v181 = vsub.f32 %v179, %v180
        %v182 = vmul.f32 %v181, 0.5
        %v183 = vtanh.pop %v182
        %v184 = vadd.f32 %v183, 1.0
        %v185 = vmul.f32 %v184, 0.5
        %v186 = vstv %s173
        %v187 = vmul.f32 %v186, %v185
        %v188 = vsub.f32 1.0, %v187
        %189 = vst [vmem:[%s170] sm:$0xff] %v188
        %s190 = sand.u32 %s75, 1
        %s191 = scalar_lea.sflag [#allocation4], %s190
        %s192 = sand.u32 %s75, 1
        %s193 = smul.addr %s192, 8
        %s194 = scalar_lea.vmem [#allocation7], %s193
        // Predicated region
        $region37: #{tpu_custom_call.1} parent=27 // pred_check
          %p195 = pneg %p85
        $region38: #{tpu_custom_call.1} parent=27 // pred_check_branch
          %197 = sbr.rel (%p195) target = $region40
        $region39: #{tpu_custom_call.1} parent=27 // pred_region
          %s199 = ssub.s32 128, 128
          %200 = vsyncadd %s191, %s199
          %s201 = smul.addr %s20, 128
          %s202 = scalar_lea.hbm %s2, %s201
          %s204 = sshll.u32 %s194, 4
          %s205 = int_to_ptr.vmem [resolvable:$true] %s204
          %207 = dma.vmem_to_hbm [thread:$0]  %s205, 128, %s202, %s191
        $region40: #{tpu_custom_call.1} parent=27 // pred_fallthru
          _
      $region28: #{tpu_custom_call.1} parent=5 // pred_fallthru
        _
      %p208 = scmp.le.s32.totalorder 2, %s15
      // Predicated region
      $region41: #{tpu_custom_call.1} parent=5 // pred_check
        %p209 = pneg %p208
      $region42: #{tpu_custom_call.1} parent=5 // pred_check_branch
        %211 = sbr.rel (%p209) target = $region44
      $region43: #{tpu_custom_call.1} parent=5 // pred_region
        %s212 = ssub.s32 %s15, 2
        // Predicated region
        $region45: #{tpu_custom_call.1} parent=43 // pred_check
          %p213 = pneg %p91
        $region46: #{tpu_custom_call.1} parent=43 // pred_check_branch
          %215 = sbr.rel (%p213) target = $region48
        $region47: #{tpu_custom_call.1} parent=43 // pred_region
          %s216 = sand.u32 %s76, 1
          %s217 = scalar_lea.sflag [#allocation4], %s216
          %s218 = sand.u32 %s76, 1
          %s219 = smul.addr %s218, 8
          %s220 = scalar_lea.vmem [#allocation7], %s219
          %221 = dma.done %s217, 128
        $region48: #{tpu_custom_call.1} parent=43 // pred_fallthru
          _
      $region44: #{tpu_custom_call.1} parent=5 // pred_fallthru
        _
    $region6: #{tpu_custom_call.1} parent=1 // loop_footer
      %s19 = sadd.s32 1, %s15
    $region7: #{tpu_custom_call.1} parent=1 // loop_footer_branch
      %14 = sbr.rel target = $region3
    $region8: #{tpu_custom_call.1} parent=1 // loop_exit
      _
    %222 = vsyncpa [#allocation3], 1
    %s223 = scalar_lea.sflag [#allocation3], 1
    %224 = vsyncpa %s223, 1
    %225 = vsyncpa [#allocation4], 1
    %s226 = scalar_lea.sflag [#allocation4], 1
    %227 = vsyncpa %s226, 1
    %228 = vsyncpa [#allocation5], 1
    %s229 = scalar_lea.sflag [#allocation5], 1
    %230 = vsyncpa %s229, 1

</llo_original>
